<compile_context>
chip_gen: v6e
topology: v6e:2x2x1
jax: 0.10.0
libtpu: 0.0.40
codegen_flags: <defaults>
</compile_context>

<pallas_src>
import functools

import jax
import jax.numpy as jnp
from jax.experimental import pallas as pl
from jax.experimental.pallas import tpu as pltpu

LANE = 128          # TPU lane width: feature dims padded to this.
SUBLANE_BF16 = 16   # bf16 sublane packing: node dim padded only to this.


def _round_up(x, m):
    return ((x + m - 1) // m) * m


def gcn_fused_kernel(a_ref, h0_ref, w_ref, b_ref, o_ref, *, n_layers):
    """All GraphConv layers fused: H_{l+1} = act(A @ (H_l @ W_l) + b_l).

    a_ref : (Np, Np)        bf16  symmetrically-normalized adjacency (padded)
    h0_ref: (Np, Fp)        bf16  input node features (padded)
    w_ref : (L, Fp, Fp)     bf16  stacked, zero-padded layer weights
    b_ref : (L, Fp)         f32   stacked, zero-padded layer biases
    o_ref : (Np, Fp)        f32   padded logits of the last layer
    """
    a = a_ref[...]                        # resident in VMEM for every layer
    h = h0_ref[...]                       # running features, bf16, on-chip
    hb = None
    for l in range(n_layers):             # static unroll over layers
        w = w_ref[l]                      # (Fp, Fp) bf16
        b = b_ref[pl.ds(l, 1), :]         # (1, Fp)  f32
        # Project first, then aggregate: A @ (H @ W) == (A @ H) @ W.
        hw = jnp.dot(h, w, preferred_element_type=jnp.float32)            # MXU
        ah = jnp.dot(a, hw.astype(jnp.bfloat16),
                     preferred_element_type=jnp.float32)                  # MXU
        hb = ah + b                                                        # f32 VPU
        if l < n_layers - 1:
            h = jnp.maximum(hb, 0.0).astype(jnp.bfloat16)                  # ReLU
    o_ref[...] = hb.astype(o_ref.dtype)


def build_gcn(a_norm, weights, biases):
    """Pads/stacks the static operands ONCE and returns a jitted forward(features)."""
    n = a_norm.shape[0]
    n_layers = len(weights)
    f_in = weights[0].shape[0]
    f_out = weights[-1].shape[1]

    n_pad = _round_up(n, SUBLANE_BF16)   # node dim: sublane-aligned only
    f_pad = LANE                         # every feature dim (16/32/8) fits in 128
    assert all(w.shape[0] <= f_pad and w.shape[1] <= f_pad for w in weights)

    # ---- static operands padded once (hoisted out of the per-call path) ----
    a_p = jnp.zeros((n_pad, n_pad), jnp.bfloat16)
    a_p = a_p.at[:n, :n].set(a_norm.astype(jnp.bfloat16))
    w_p = jnp.stack([
        jnp.zeros((f_pad, f_pad), jnp.bfloat16)
        .at[:w.shape[0], :w.shape[1]].set(w.astype(jnp.bfloat16))
        for w in weights
    ])
    b_p = jnp.stack([
        jnp.zeros((f_pad,), jnp.float32).at[:b.shape[0]].set(b.astype(jnp.float32))
        for b in biases
    ])
    a_p, w_p, b_p = jax.device_put((a_p, w_p, b_p))

    # True (unpadded) cost estimate — advisory only.
    flops = 0
    for w in weights:
        fi, fo = w.shape
        flops += 2 * n * fi * fo + 2 * n * n * fo
    bytes_accessed = (n * n * 2 + n * f_in * 2
                      + sum(w.size for w in weights) * 2
                      + sum(b.size for b in biases) * 4
                      + n * f_out * 4)

    kernel = functools.partial(gcn_fused_kernel, n_layers=n_layers)
    call = pl.pallas_call(
        kernel,
        out_shape=jax.ShapeDtypeStruct((n_pad, f_pad), jnp.float32),
        grid=(1,),
        in_specs=[
            pl.BlockSpec((n_pad, n_pad), lambda i: (0, 0)),
            pl.BlockSpec((n_pad, f_pad), lambda i: (0, 0)),
            pl.BlockSpec((n_layers, f_pad, f_pad), lambda i: (0, 0, 0)),
            pl.BlockSpec((n_layers, f_pad), lambda i: (0, 0)),
        ],
        out_specs=pl.BlockSpec((n_pad, f_pad), lambda i: (0, 0)),
        compiler_params=pltpu.CompilerParams(
            dimension_semantics=("arbitrary",)),
        cost_estimate=pl.CostEstimate(
            flops=flops, transcendentals=0, bytes_accessed=bytes_accessed),
    )

    @jax.jit
    def forward(features):
        # Only the per-call feature matrix gets padded here.
        h_p = jnp.zeros((n_pad, f_pad), jnp.bfloat16)
        h_p = h_p.at[:n, :f_in].set(features.astype(jnp.bfloat16))
        out_p = call(a_p, h_p, w_p, b_p)
        return out_p[:n, :f_out]

    return forward


def build_normalized_adjacency(n_nodes):
    """Deterministic small graph: undirected ring + self-loops, sym-normalized."""
    idx = jnp.arange(n_nodes)
    a = jnp.zeros((n_nodes, n_nodes), jnp.float32)
    a = a.at[idx, (idx + 1) % n_nodes].set(1.0)
    a = a.at[(idx + 1) % n_nodes, idx].set(1.0)
    a = a.at[idx, idx].set(1.0)  # self-loops (DGL requires no zero-degree nodes)
    deg = a.sum(axis=1)
    d_inv_sqrt = 1.0 / jnp.sqrt(deg)
    return d_inv_sqrt[:, None] * a * d_inv_sqrt[None, :]


def init_params(key, dims):
    """Xavier-uniform weights (DGL default), zero biases, deterministic."""
    weights, biases = [], []
    keys = jax.random.split(key, len(dims) - 1)
    for i in range(len(dims) - 1):
        f_in, f_out = dims[i], dims[i + 1]
        bound = jnp.sqrt(6.0 / (f_in + f_out))
        w = jax.random.uniform(
            keys[i], (f_in, f_out), jnp.float32, minval=-bound, maxval=bound
        )
        weights.append(w)
        biases.append(jnp.zeros((f_out,), jnp.float32))
    return weights, biases


if __name__ == "__main__":
    # Small shapes consistent with the module:
    #   GCN(g, in_feats=16, n_hidden=32, n_classes=8, n_layers=2, F.relu, 0.5)
    #   -> GraphConv(16,32,relu), GraphConv(32,32,relu), GraphConv(32,8)
    n_nodes = 64
    in_feats, n_hidden, n_classes, n_layers = 16, 32, 8, 2

    key = jax.random.PRNGKey(0)
    k_feat, k_params = jax.random.split(key)

    a_norm = build_normalized_adjacency(n_nodes)
    features = jax.random.normal(k_feat, (n_nodes, in_feats), jnp.float32)

    dims = [in_feats] + [n_hidden] * n_layers + [n_classes]
    weights, biases = init_params(k_params, dims)

    forward = build_gcn(a_norm, weights, biases)
    out = forward(features)
    out = jax.block_until_ready(out)
    assert out.shape == (n_nodes, n_classes)
    assert bool(jnp.all(jnp.isfinite(out)))

    # Loose-tolerance sanity check vs. a pure-JAX f32 reference
    # (kernel feeds the MXU bf16 inputs with f32 accumulation).
    ref = features
    for i, (w, b) in enumerate(zip(weights, biases)):
        ref = a_norm @ (ref @ w) + b
        if i < len(weights) - 1:
            ref = jnp.maximum(ref, 0.0)
    assert jnp.allclose(out, ref, rtol=1e-1, atol=1e-1)

    print("KERNEL_OK")
</pallas_src>

<mosaic_0001>
module attributes {stable_mosaic.version = 11 : i64} {
  func.func @gcn_fused_kernel(%arg0: i32, %arg1: memref<64x64xbf16, #tpu.memory_space<vmem>>, %arg2: memref<64x128xbf16, #tpu.memory_space<vmem>>, %arg3: memref<3x128x128xbf16, #tpu.memory_space<vmem>>, %arg4: memref<3x128xf32, #tpu.memory_space<vmem>>, %arg5: memref<64x128xf32, #tpu.memory_space<vmem>>) attributes {dimension_semantics = [#tpu.dimension_semantics<arbitrary>], iteration_bounds = array<i64: 1>, scalar_prefetch = 0 : i64, scratch_operands = 0 : i64, tpu.core_type = #tpu.core_type<tc>, window_params = [{pipeline_mode = #tpu.pipeline_mode<synchronous>, transform_indices = @transform_0, window_bounds = array<i64: 64, 64>}, {pipeline_mode = #tpu.pipeline_mode<synchronous>, transform_indices = @transform_1, window_bounds = array<i64: 64, 128>}, {pipeline_mode = #tpu.pipeline_mode<synchronous>, transform_indices = @transform_2, window_bounds = array<i64: 3, 128, 128>}, {pipeline_mode = #tpu.pipeline_mode<synchronous>, transform_indices = @transform_3, window_bounds = array<i64: 3, 128>}, {pipeline_mode = #tpu.pipeline_mode<synchronous>, transform_indices = @transform_4, window_bounds = array<i64: 64, 128>}]} {
    %c0 = arith.constant 0 : index
    %c0_0 = arith.constant 0 : index
    %0 = vector.load %arg1[%c0, %c0_0] : memref<64x64xbf16, #tpu.memory_space<vmem>>, vector<64x64xbf16>
    %c0_1 = arith.constant 0 : index
    %c0_2 = arith.constant 0 : index
    %1 = vector.load %arg2[%c0_1, %c0_2] : memref<64x128xbf16, #tpu.memory_space<vmem>>, vector<64x128xbf16>
    %c0_3 = arith.constant 0 : index
    %c0_4 = arith.constant 0 : index
    %c0_5 = arith.constant 0 : index
    %2 = vector.load %arg3[%c0_3, %c0_4, %c0_5] : memref<3x128x128xbf16, #tpu.memory_space<vmem>>, vector<1x128x128xbf16>
    %3 = vector.shape_cast %2 : vector<1x128x128xbf16> to vector<128x128xbf16>
    %c0_6 = arith.constant 0 : index
    %c0_7 = arith.constant 0 : index
    %4 = vector.load %arg4[%c0_6, %c0_7] : memref<3x128xf32, #tpu.memory_space<vmem>>, vector<1x128xf32>
    %cst = arith.constant dense<0.000000e+00> : vector<64x128xf32>
    %5 = tpu.matmul %1, %3, %cst {dimension_numbers = #tpu.dot_dimension_numbers<[1], [0], [0], [1], [0, 0, 1, 1], [], []>} : vector<64x128xbf16>, vector<128x128xbf16>, vector<64x128xf32> -> vector<64x128xf32>
    %6 = arith.truncf %5 : vector<64x128xf32> to vector<64x128xbf16>
    %cst_8 = arith.constant dense<0.000000e+00> : vector<64x128xf32>
    %7 = tpu.matmul %0, %6, %cst_8 {dimension_numbers = #tpu.dot_dimension_numbers<[1], [0], [0], [1], [0, 0, 1, 1], [], []>} : vector<64x64xbf16>, vector<64x128xbf16>, vector<64x128xf32> -> vector<64x128xf32>
    %8 = vector.broadcast %4 : vector<1x128xf32> to vector<64x128xf32>
    %9 = arith.addf %7, %8 : vector<64x128xf32>
    %cst_9 = arith.constant 0.000000e+00 : f32
    %10 = vector.broadcast %cst_9 : f32 to vector<64x128xf32>
    %11 = arith.maximumf %9, %10 : vector<64x128xf32>
    %12 = arith.truncf %11 : vector<64x128xf32> to vector<64x128xbf16>
    %c1 = arith.constant 1 : index
    %c0_10 = arith.constant 0 : index
    %c0_11 = arith.constant 0 : index
    %13 = vector.load %arg3[%c1, %c0_10, %c0_11] : memref<3x128x128xbf16, #tpu.memory_space<vmem>>, vector<1x128x128xbf16>
    %14 = vector.shape_cast %13 : vector<1x128x128xbf16> to vector<128x128xbf16>
    %c1_12 = arith.constant 1 : index
    %c0_13 = arith.constant 0 : index
    %15 = vector.load %arg4[%c1_12, %c0_13] : memref<3x128xf32, #tpu.memory_space<vmem>>, vector<1x128xf32>
    %cst_14 = arith.constant dense<0.000000e+00> : vector<64x128xf32>
    %16 = tpu.matmul %12, %14, %cst_14 {dimension_numbers = #tpu.dot_dimension_numbers<[1], [0], [0], [1], [0, 0, 1, 1], [], []>} : vector<64x128xbf16>, vector<128x128xbf16>, vector<64x128xf32> -> vector<64x128xf32>
    %17 = arith.truncf %16 : vector<64x128xf32> to vector<64x128xbf16>
    %cst_15 = arith.constant dense<0.000000e+00> : vector<64x128xf32>
    %18 = tpu.matmul %0, %17, %cst_15 {dimension_numbers = #tpu.dot_dimension_numbers<[1], [0], [0], [1], [0, 0, 1, 1], [], []>} : vector<64x64xbf16>, vector<64x128xbf16>, vector<64x128xf32> -> vector<64x128xf32>
    %19 = vector.broadcast %15 : vector<1x128xf32> to vector<64x128xf32>
    %20 = arith.addf %18, %19 : vector<64x128xf32>
    %cst_16 = arith.constant 0.000000e+00 : f32
    %21 = vector.broadcast %cst_16 : f32 to vector<64x128xf32>
    %22 = arith.maximumf %20, %21 : vector<64x128xf32>
    %23 = arith.truncf %22 : vector<64x128xf32> to vector<64x128xbf16>
    %c2 = arith.constant 2 : index
    %c0_17 = arith.constant 0 : index
    %c0_18 = arith.constant 0 : index
    %24 = vector.load %arg3[%c2, %c0_17, %c0_18] : memref<3x128x128xbf16, #tpu.memory_space<vmem>>, vector<1x128x128xbf16>
    %25 = vector.shape_cast %24 : vector<1x128x128xbf16> to vector<128x128xbf16>
    %c2_19 = arith.constant 2 : index
    %c0_20 = arith.constant 0 : index
    %26 = vector.load %arg4[%c2_19, %c0_20] : memref<3x128xf32, #tpu.memory_space<vmem>>, vector<1x128xf32>
    %cst_21 = arith.constant dense<0.000000e+00> : vector<64x128xf32>
    %27 = tpu.matmul %23, %25, %cst_21 {dimension_numbers = #tpu.dot_dimension_numbers<[1], [0], [0], [1], [0, 0, 1, 1], [], []>} : vector<64x128xbf16>, vector<128x128xbf16>, vector<64x128xf32> -> vector<64x128xf32>
    %28 = arith.truncf %27 : vector<64x128xf32> to vector<64x128xbf16>
    %cst_22 = arith.constant dense<0.000000e+00> : vector<64x128xf32>
    %29 = tpu.matmul %0, %28, %cst_22 {dimension_numbers = #tpu.dot_dimension_numbers<[1], [0], [0], [1], [0, 0, 1, 1], [], []>} : vector<64x64xbf16>, vector<64x128xbf16>, vector<64x128xf32> -> vector<64x128xf32>
    %30 = vector.broadcast %26 : vector<1x128xf32> to vector<64x128xf32>
    %31 = arith.addf %29, %30 : vector<64x128xf32>
    %c0_23 = arith.constant 0 : index
    %c0_24 = arith.constant 0 : index
    %32 = vector.load %arg5[%c0_23, %c0_24] : memref<64x128xf32, #tpu.memory_space<vmem>>, vector<64x128xf32>
    tpu.vector_store %arg5[%c0_23, %c0_24], %31 {strides = array<i32>} : memref<64x128xf32, #tpu.memory_space<vmem>>, vector<64x128xf32>,
    return
  }
  func.func @transform_0(%arg0: i32) -> (i32, i32) {
    %c0_i32 = arith.constant 0 : i32
    %c0_i32_0 = arith.constant 0 : i32
    %c0_i32_1 = arith.constant 0 : i32
    return %c0_i32, %c0_i32_0 : i32, i32
  }
  func.func @transform_1(%arg0: i32) -> (i32, i32) {
    %c0_i32 = arith.constant 0 : i32
    %c0_i32_0 = arith.constant 0 : i32
    %c0_i32_1 = arith.constant 0 : i32
    return %c0_i32, %c0_i32_0 : i32, i32
  }
  func.func @transform_2(%arg0: i32) -> (i32, i32, i32) {
    %c0_i32 = arith.constant 0 : i32
    %c0_i32_0 = arith.constant 0 : i32
    %c0_i32_1 = arith.constant 0 : i32
    %c0_i32_2 = arith.constant 0 : i32
    return %c0_i32, %c0_i32_0, %c0_i32_1 : i32, i32, i32
  }
  func.func @transform_3(%arg0: i32) -> (i32, i32) {
    %c0_i32 = arith.constant 0 : i32
    %c0_i32_0 = arith.constant 0 : i32
    %c0_i32_1 = arith.constant 0 : i32
    return %c0_i32, %c0_i32_0 : i32, i32
  }
  func.func @transform_4(%arg0: i32) -> (i32, i32) {
    %c0_i32 = arith.constant 0 : i32
    %c0_i32_0 = arith.constant 0 : i32
    %c0_i32_1 = arith.constant 0 : i32
    return %c0_i32, %c0_i32_0 : i32, i32
  }
}

</mosaic_0001>

<llo_original>
// kernel: forward.1
$region0: #{forward.1}
  #allocation0 [shape = 'u32[]', space=smem, size = 0x4, offset = 0x4, fixed_abs, tag = 'smem constant byte address 0x4 - core index']
  #allocation1 [shape = 'u32[144,128]{1,0:T(1,128)}', space=vmem, size = 0x12000, scoped, tag = 'internal scratch']
  %s0 = inlined_call_operand.vmem [shape: bf16[64,64], index: 0, kind: input, shape index: {}]
  %s1 = inlined_call_operand.vmem [shape: bf16[64,128], index: 1, kind: input, shape index: {}]
  %s2 = inlined_call_operand.hbm [shape: bf16[3,128,128], index: 2, kind: input, shape index: {}]
  %s3 = inlined_call_operand.vmem [shape: f32[3,128], index: 3, kind: input, shape index: {}]
  %s4 = inlined_call_operand.vmem [shape: f32[64,128], index: 4, kind: output, shape index: {}]
  %s5 = sld [smem:[#allocation0]]
  $region30: #{forward.1} parent=0
    _
  %s7 = ssub.s32 1, %s5
  %s8 = scalar_select 0, %s7, %s5
  $region1: #{forward.1} parent=0
    #allocation2 [shape = 'u8[98304]{0}', space=vmem, size = 0x18000, scoped, tag = 'input window, operand 2, single buffered']
    #allocation3 [shape = 's32[1]{0}', space=sflag, size = 0x4, scoped, tag = 'scoped memory for forward.1']
    %9 = vsyncpa [#allocation3], 0
    // Predicated region
    $region2: #{forward.1} parent=1 // pred_check
      _
    $region3: #{forward.1} parent=1 // pred_check_branch
      %11 = sbr.rel (0) target = $region5
    $region4: #{forward.1} parent=1 // pred_region
      _
    $region5: #{forward.1} parent=1 // pred_fallthru
      _
    // Predicated region
    $region6: #{forward.1} parent=1 // pred_check
      _
    $region7: #{forward.1} parent=1 // pred_check_branch
      %13 = sbr.rel (0) target = $region9
    $region8: #{forward.1} parent=1 // pred_region
      _
    $region9: #{forward.1} parent=1 // pred_fallthru
      _
    // Predicated region
    $region10: #{forward.1} parent=1 // pred_check
      _
    $region11: #{forward.1} parent=1 // pred_check_branch
      %15 = sbr.rel (0) target = $region13
    $region12: #{forward.1} parent=1 // pred_region
      %s17 = ssub.s32 3072, 3072
      %18 = vsyncadd [#allocation3], %s17
      %s19 = sshll.u32 [#allocation2], 4
      %s20 = int_to_ptr.vmem [resolvable:$true] %s19
      %25 = dma.hbm_to_vmem [thread:$0]  %s2, 3072, %s20, [#allocation3], 64, 64, 4
    $region13: #{forward.1} parent=1 // pred_fallthru
      _
    // Predicated region
    $region14: #{forward.1} parent=1 // pred_check
      _
    $region15: #{forward.1} parent=1 // pred_check_branch
      %27 = sbr.rel (0) target = $region17
    $region16: #{forward.1} parent=1 // pred_region
      _
    $region17: #{forward.1} parent=1 // pred_fallthru
      _
    // Predicated region
    $region18: #{forward.1} parent=1 // pred_check
      _
    $region19: #{forward.1} parent=1 // pred_check_branch
      %29 = sbr.rel (0) target = $region21
    $region20: #{forward.1} parent=1 // pred_region
      %30 = dma.done [#allocation3], 3072
    $region21: #{forward.1} parent=1 // pred_fallthru
      _
    %v32 = vld [vmem:[%s0] sm:$0xf]
    %v33 = vld [vmem:[%s0 + $0x4] sm:$0xf]
    %v34 = vld [vmem:[%s0 + $0x8] sm:$0xf]
    %v35 = vld [vmem:[%s0 + $0xc] sm:$0xf]
    %v36 = vld [vmem:[%s0 + $0x10] sm:$0xf]
    %v37 = vld [vmem:[%s0 + $0x14] sm:$0xf]
    %v38 = vld [vmem:[%s0 + $0x18] sm:$0xf]
    %v39 = vld [vmem:[%s0 + $0x1c] sm:$0xf]
    %v40 = vld [vmem:[%s1] sm:$0xf]
    %v41 = vld [vmem:[%s1 + $0x4] sm:$0xf]
    %v42 = vld [vmem:[%s1 + $0x8] sm:$0xf]
    %v43 = vld [vmem:[%s1 + $0xc] sm:$0xf]
    %v44 = vld [vmem:[%s1 + $0x10] sm:$0xf]
    %v45 = vld [vmem:[%s1 + $0x14] sm:$0xf]
    %v46 = vld [vmem:[%s1 + $0x18] sm:$0xf]
    %v47 = vld [vmem:[%s1 + $0x1c] sm:$0xf]
    %v48 = vld [vmem:[#allocation2] sm:$0xf]
    %v49 = vld [vmem:[#allocation2 + $0x4] sm:$0xf]
    %v50 = vld [vmem:[#allocation2 + $0x8] sm:$0xf]
    %v51 = vld [vmem:[#allocation2 + $0xc] sm:$0xf]
    %v52 = vld [vmem:[#allocation2 + $0x10] sm:$0xf]
    %v53 = vld [vmem:[#allocation2 + $0x14] sm:$0xf]
    %v54 = vld [vmem:[#allocation2 + $0x18] sm:$0xf]
    %v55 = vld [vmem:[#allocation2 + $0x1c] sm:$0xf]
    %v56 = vld [vmem:[#allocation2 + $0x20] sm:$0xf]
    %v57 = vld [vmem:[#allocation2 + $0x24] sm:$0xf]
    %v58 = vld [vmem:[#allocation2 + $0x28] sm:$0xf]
    %v59 = vld [vmem:[#allocation2 + $0x2c] sm:$0xf]
    %v60 = vld [vmem:[#allocation2 + $0x30] sm:$0xf]
    %v61 = vld [vmem:[#allocation2 + $0x34] sm:$0xf]
    %v62 = vld [vmem:[#allocation2 + $0x38] sm:$0xf]
    %v63 = vld [vmem:[#allocation2 + $0x3c] sm:$0xf]
    %v64 = vld [vmem:[%s3] sm:$0x1]
    %v73 = vunpack.c.l.b16 %v40
    %v74 = vunpack.c.l.b16 %v41
    %v75 = vunpack.c.l.b16 %v42
    %v76 = vunpack.c.l.b16 %v43
    %v77 = vunpack.c.l.b16 %v44
    %v78 = vunpack.c.l.b16 %v45
    %v79 = vunpack.c.l.b16 %v46
    %v80 = vunpack.c.l.b16 %v47
    %v81 = vpack.c.b16 %v74, %v73
    %v82 = vpack.c.b16 %v76, %v75
    %v83 = vpack.c.b16 %v78, %v77
    %v84 = vpack.c.b16 %v80, %v79
    %v105 = vunpack.c.l.b16 %v48
    %v106 = vunpack.c.l.b16 %v49
    %v107 = vunpack.c.l.b16 %v50
    %v108 = vunpack.c.l.b16 %v51
    %v109 = vunpack.c.l.b16 %v52
    %v110 = vunpack.c.l.b16 %v53
    %v111 = vunpack.c.l.b16 %v54
    %v112 = vunpack.c.l.b16 %v55
    %v113 = vunpack.c.l.b16 %v56
    %v114 = vunpack.c.l.b16 %v57
    %v115 = vunpack.c.l.b16 %v58
    %v116 = vunpack.c.l.b16 %v59
    %v117 = vunpack.c.l.b16 %v60
    %v118 = vunpack.c.l.b16 %v61
    %v119 = vunpack.c.l.b16 %v62
    %v120 = vunpack.c.l.b16 %v63
    %v121 = vpack.c.b16 %v106, %v105
    %v122 = vpack.c.b16 %v108, %v107
    %v123 = vpack.c.b16 %v110, %v109
    %v124 = vpack.c.b16 %v112, %v111
    %v125 = vpack.c.b16 %v114, %v113
    %v126 = vpack.c.b16 %v116, %v115
    %v127 = vpack.c.b16 %v118, %v117
    %v128 = vpack.c.b16 %v120, %v119
    %137 = vmatprep.subr.bf16.mxu0 0
    %138 = vmatpush1.bf16.msra.mxu0 %v128
    %139 = vmatprep.subr.bf16.mxu0 0
    %140 = vmatpush1.bf16.msra.mxu0 %v127
    %141 = vmatprep.subr.bf16.mxu0 0
    %142 = vmatpush1.bf16.msra.mxu0 %v126
    %143 = vmatprep.subr.bf16.mxu0 0
    %144 = vmatpush1.bf16.msra.mxu0 %v125
    %145 = vmatprep.subr.bf16.mxu0 0
    %146 = vmatpush1.bf16.msra.mxu0 %v124
    %147 = vmatprep.subr.bf16.mxu0 0
    %148 = vmatpush1.bf16.msra.mxu0 %v123
    %149 = vmatprep.subr.bf16.mxu0 0
    %150 = vmatpush1.bf16.msra.mxu0 %v122
    %151 = vmatprep.subr.bf16.mxu0 0
    %152 = vmatpush1.bf16.msra.mxu0 %v121
    %153 = vmatprep.subr.bf16.mxu0 0
    %154 = vmatpush2.bf16.msra.mxu0 0
    %155 = vmatprep.subr.bf16.mxu0 0
    %156 = vmatpush2.bf16.msra.mxu0 0
    %157 = vmatprep.subr.bf16.mxu0 0
    %158 = vmatpush2.bf16.msra.mxu0 0
    %159 = vmatprep.subr.bf16.mxu0 0
    %160 = vmatpush2.bf16.msra.mxu0 0
    %161 = vmatprep.subr.bf16.mxu0 0
    %162 = vmatpush2.bf16.msra.mxu0 0
    %163 = vmatprep.subr.bf16.mxu0 0
    %164 = vmatpush2.bf16.msra.mxu0 0
    %165 = vmatprep.subr.bf16.mxu0 0
    %166 = vmatpush2.bf16.msra.mxu0 0
    %167 = vmatprep.subr.bf16.mxu0 0
    %168 = vmatpush2.bf16.msra.mxu0 0
    %169 = vmatprep.mubr.bf16.mxu0 0
    %170 = vmatmul.mubr.bf16.gmra.mxu0 %v81
    %v171 = vpop.f32.mrf.mxu0
    %v172 = vadd.f32 0.0, %v171
    %v173 = vpop.f32.mrf.mxu0
    %v174 = vpop.f32.mrf.mxu0
    %v175 = vadd.f32 0.0, %v174
    %v176 = vpop.f32.mrf.mxu0
    %177 = vmatprep.mubr.bf16.mxu0 0
    %178 = vmatmul.mubr.bf16.gmra.mxu0 %v82
    %v179 = vpop.f32.mrf.mxu0
    %v180 = vadd.f32 0.0, %v179
    %v181 = vpop.f32.mrf.mxu0
    %v182 = vpop.f32.mrf.mxu0
    %v183 = vadd.f32 0.0, %v182
    %v184 = vpop.f32.mrf.mxu0
    %185 = vmatprep.mubr.bf16.mxu0 0
    %186 = vmatmul.mubr.bf16.gmra.mxu0 %v83
    %v187 = vpop.f32.mrf.mxu0
    %v188 = vadd.f32 0.0, %v187
    %v189 = vpop.f32.mrf.mxu0
    %v190 = vpop.f32.mrf.mxu0
    %v191 = vadd.f32 0.0, %v190
    %v192 = vpop.f32.mrf.mxu0
    %193 = vmatprep.mubr.bf16.mxu0 0
    %194 = vmatmul.mubr.bf16.gmra.mxu0 %v84
    %v195 = vpop.f32.mrf.mxu0
    %v196 = vadd.f32 0.0, %v195
    %v197 = vpop.f32.mrf.mxu0
    %v198 = vpop.f32.mrf.mxu0
    %v199 = vadd.f32 0.0, %v198
    %v200 = vpop.f32.mrf.mxu0
    %201 = vdwg.mxu0
    %v202 = vpack.c.bf16 %v175, %v172
    %v203 = vpack.c.bf16 %v183, %v180
    %v204 = vpack.c.bf16 %v191, %v188
    %v205 = vpack.c.bf16 %v199, %v196
    %v206 = vlaneseq
    %v207 = vshrl.u32 %v206, 7
    %v208 = vsub.s32 0, %v207
    %v209 = vrot.slane %v64, %v208
    %v218 = vunpack.c.l.b16 %v32
    %v219 = vunpack.c.l.b16 %v33
    %v220 = vunpack.c.l.b16 %v34
    %v221 = vunpack.c.l.b16 %v35
    %v222 = vunpack.c.l.b16 %v36
    %v223 = vunpack.c.l.b16 %v37
    %v224 = vunpack.c.l.b16 %v38
    %v225 = vunpack.c.l.b16 %v39
    %v226 = vpack.c.b16 %v219, %v218
    %v227 = vpack.c.b16 %v221, %v220
    %v228 = vpack.c.b16 %v223, %v222
    %v229 = vpack.c.b16 %v225, %v224
    %vm230 = vcmask 523264
    %v232 = vsel %vm230, %v226, 0
    %v235 = vsel %vm230, %v227, 0
    %v238 = vsel %vm230, %v228, 0
    %v241 = vsel %vm230, %v229, 0
    %243 = vmatprep.subr.bf16.mxu0 0
    %244 = vmatpush1.bf16.msra.mxu0 0
    %245 = vmatprep.subr.bf16.mxu0 0
    %246 = vmatpush1.bf16.msra.mxu0 0
    %247 = vmatprep.subr.bf16.mxu0 0
    %248 = vmatpush1.bf16.msra.mxu0 0
    %249 = vmatprep.subr.bf16.mxu0 0
    %250 = vmatpush1.bf16.msra.mxu0 0
    %251 = vmatprep.subr.bf16.mxu0 0
    %252 = vmatpush1.bf16.msra.mxu0 %v205
    %253 = vmatprep.subr.bf16.mxu0 0
    %254 = vmatpush1.bf16.msra.mxu0 %v204
    %255 = vmatprep.subr.bf16.mxu0 0
    %256 = vmatpush1.bf16.msra.mxu0 %v203
    %257 = vmatprep.subr.bf16.mxu0 0
    %258 = vmatpush1.bf16.msra.mxu0 %v202
    %259 = vmatprep.subr.bf16.mxu0 0
    %260 = vmatpush2.bf16.msra.mxu0 0
    %261 = vmatprep.subr.bf16.mxu0 0
    %262 = vmatpush2.bf16.msra.mxu0 0
    %263 = vmatprep.subr.bf16.mxu0 0
    %264 = vmatpush2.bf16.msra.mxu0 0
    %265 = vmatprep.subr.bf16.mxu0 0
    %266 = vmatpush2.bf16.msra.mxu0 0
    %267 = vmatprep.subr.bf16.mxu0 0
    %268 = vmatpush2.bf16.msra.mxu0 0
    %269 = vmatprep.subr.bf16.mxu0 0
    %270 = vmatpush2.bf16.msra.mxu0 0
    %271 = vmatprep.subr.bf16.mxu0 0
    %272 = vmatpush2.bf16.msra.mxu0 0
    %273 = vmatprep.subr.bf16.mxu0 0
    %274 = vmatpush2.bf16.msra.mxu0 0
    %275 = vmatprep.mubr.bf16.mxu0 0
    %276 = vmatmul.mubr.bf16.gmra.mxu0 %v232
    %v277 = vpop.f32.mrf.mxu0
    %v278 = vadd.f32 %v209, %v277
    %v279 = vpop.f32.mrf.mxu0
    %v280 = vpop.f32.mrf.mxu0
    %v281 = vadd.f32 %v209, %v280
    %v282 = vpop.f32.mrf.mxu0
    %283 = vmatprep.mubr.bf16.mxu0 0
    %284 = vmatmul.mubr.bf16.gmra.mxu0 %v235
    %v285 = vpop.f32.mrf.mxu0
    %v286 = vadd.f32 %v209, %v285
    %v287 = vpop.f32.mrf.mxu0
    %v288 = vpop.f32.mrf.mxu0
    %v289 = vadd.f32 %v209, %v288
    %v290 = vpop.f32.mrf.mxu0
    %291 = vmatprep.mubr.bf16.mxu0 0
    %292 = vmatmul.mubr.bf16.gmra.mxu0 %v238
    %v293 = vpop.f32.mrf.mxu0
    %v294 = vadd.f32 %v209, %v293
    %v295 = vpop.f32.mrf.mxu0
    %v296 = vpop.f32.mrf.mxu0
    %v297 = vadd.f32 %v209, %v296
    %v298 = vpop.f32.mrf.mxu0
    %299 = vmatprep.mubr.bf16.mxu0 0
    %300 = vmatmul.mubr.bf16.gmra.mxu0 %v241
    %v301 = vpop.f32.mrf.mxu0
    %v302 = vadd.f32 %v209, %v301
    %v303 = vpop.f32.mrf.mxu0
    %v304 = vpop.f32.mrf.mxu0
    %v305 = vadd.f32 %v209, %v304
    %v306 = vpop.f32.mrf.mxu0
    %307 = vdwg.mxu0
    %v308 = vmax.f32 %v278, 0.0
    %v309 = vmax.f32 %v281, 0.0
    %v310 = vmax.f32 %v286, 0.0
    %v311 = vmax.f32 %v289, 0.0
    %v312 = vmax.f32 %v294, 0.0
    %v313 = vmax.f32 %v297, 0.0
    %v314 = vmax.f32 %v302, 0.0
    %v315 = vmax.f32 %v305, 0.0
    %v316 = vpack.c.bf16 %v309, %v308
    %v317 = vpack.c.bf16 %v311, %v310
    %v318 = vpack.c.bf16 %v313, %v312
    %v319 = vpack.c.bf16 %v315, %v314
    %s320 = scalar_lea.vmem [#allocation2], 64
    %v321 = vld [vmem:[%s320] sm:$0xf]
    %v322 = vld [vmem:[%s320 + $0x4] sm:$0xf]
    %v323 = vld [vmem:[%s320 + $0x8] sm:$0xf]
    %v324 = vld [vmem:[%s320 + $0xc] sm:$0xf]
    %v325 = vld [vmem:[%s320 + $0x10] sm:$0xf]
    %v326 = vld [vmem:[%s320 + $0x14] sm:$0xf]
    %v327 = vld [vmem:[%s320 + $0x18] sm:$0xf]
    %v328 = vld [vmem:[%s320 + $0x1c] sm:$0xf]
    %v329 = vld [vmem:[%s320 + $0x20] sm:$0xf]
    %v330 = vld [vmem:[%s320 + $0x24] sm:$0xf]
    %v331 = vld [vmem:[%s320 + $0x28] sm:$0xf]
    %v332 = vld [vmem:[%s320 + $0x2c] sm:$0xf]
    %v333 = vld [vmem:[%s320 + $0x30] sm:$0xf]
    %v334 = vld [vmem:[%s320 + $0x34] sm:$0xf]
    %v335 = vld [vmem:[%s320 + $0x38] sm:$0xf]
    %v336 = vld [vmem:[%s320 + $0x3c] sm:$0xf]
    %v337 = vld [vmem:[%s3 + $0x1] sm:$0x1]
    %v354 = vunpack.c.l.b16 %v321
    %v355 = vunpack.c.l.b16 %v322
    %v356 = vunpack.c.l.b16 %v323
    %v357 = vunpack.c.l.b16 %v324
    %v358 = vunpack.c.l.b16 %v325
    %v359 = vunpack.c.l.b16 %v326
    %v360 = vunpack.c.l.b16 %v327
    %v361 = vunpack.c.l.b16 %v328
    %v362 = vunpack.c.l.b16 %v329
    %v363 = vunpack.c.l.b16 %v330
    %v364 = vunpack.c.l.b16 %v331
    %v365 = vunpack.c.l.b16 %v332
    %v366 = vunpack.c.l.b16 %v333
    %v367 = vunpack.c.l.b16 %v334
    %v368 = vunpack.c.l.b16 %v335
    %v369 = vunpack.c.l.b16 %v336
    %v370 = vpack.c.b16 %v355, %v354
    %v371 = vpack.c.b16 %v357, %v356
    %v372 = vpack.c.b16 %v359, %v358
    %v373 = vpack.c.b16 %v361, %v360
    %v374 = vpack.c.b16 %v363, %v362
    %v375 = vpack.c.b16 %v365, %v364
    %v376 = vpack.c.b16 %v367, %v366
    %v377 = vpack.c.b16 %v369, %v368
    %386 = vmatprep.subr.bf16.mxu0 0
    %387 = vmatpush1.bf16.msra.mxu0 %v377
    %388 = vmatprep.subr.bf16.mxu0 0
    %389 = vmatpush1.bf16.msra.mxu0 %v376
    %390 = vmatprep.subr.bf16.mxu0 0
    %391 = vmatpush1.bf16.msra.mxu0 %v375
    %392 = vmatprep.subr.bf16.mxu0 0
    %393 = vmatpush1.bf16.msra.mxu0 %v374
    %394 = vmatprep.subr.bf16.mxu0 0
    %395 = vmatpush1.bf16.msra.mxu0 %v373
    %396 = vmatprep.subr.bf16.mxu0 0
    %397 = vmatpush1.bf16.msra.mxu0 %v372
    %398 = vmatprep.subr.bf16.mxu0 0
    %399 = vmatpush1.bf16.msra.mxu0 %v371
    %400 = vmatprep.subr.bf16.mxu0 0
    %401 = vmatpush1.bf16.msra.mxu0 %v370
    %402 = vmatprep.subr.bf16.mxu0 0
    %403 = vmatpush2.bf16.msra.mxu0 0
    %404 = vmatprep.subr.bf16.mxu0 0
    %405 = vmatpush2.bf16.msra.mxu0 0
    %406 = vmatprep.subr.bf16.mxu0 0
    %407 = vmatpush2.bf16.msra.mxu0 0
    %408 = vmatprep.subr.bf16.mxu0 0
    %409 = vmatpush2.bf16.msra.mxu0 0
    %410 = vmatprep.subr.bf16.mxu0 0
    %411 = vmatpush2.bf16.msra.mxu0 0
    %412 = vmatprep.subr.bf16.mxu0 0
    %413 = vmatpush2.bf16.msra.mxu0 0
    %414 = vmatprep.subr.bf16.mxu0 0
    %415 = vmatpush2.bf16.msra.mxu0 0
    %416 = vmatprep.subr.bf16.mxu0 0
    %417 = vmatpush2.bf16.msra.mxu0 0
    %418 = vmatprep.mubr.bf16.mxu0 0
    %419 = vmatmul.mubr.bf16.gmra.mxu0 %v316
    %v420 = vpop.f32.mrf.mxu0
    %v421 = vadd.f32 0.0, %v420
    %v422 = vpop.f32.mrf.mxu0
    %v423 = vpop.f32.mrf.mxu0
    %v424 = vadd.f32 0.0, %v423
    %v425 = vpop.f32.mrf.mxu0
    %426 = vmatprep.mubr.bf16.mxu0 0
    %427 = vmatmul.mubr.bf16.gmra.mxu0 %v317
    %v428 = vpop.f32.mrf.mxu0
    %v429 = vadd.f32 0.0, %v428
    %v430 = vpop.f32.mrf.mxu0
    %v431 = vpop.f32.mrf.mxu0
    %v432 = vadd.f32 0.0, %v431
    %v433 = vpop.f32.mrf.mxu0
    %434 = vmatprep.mubr.bf16.mxu0 0
    %435 = vmatmul.mubr.bf16.gmra.mxu0 %v318
    %v436 = vpop.f32.mrf.mxu0
    %v437 = vadd.f32 0.0, %v436
    %v438 = vpop.f32.mrf.mxu0
    %v439 = vpop.f32.mrf.mxu0
    %v440 = vadd.f32 0.0, %v439
    %v441 = vpop.f32.mrf.mxu0
    %442 = vmatprep.mubr.bf16.mxu0 0
    %443 = vmatmul.mubr.bf16.gmra.mxu0 %v319
    %v444 = vpop.f32.mrf.mxu0
    %v445 = vadd.f32 0.0, %v444
    %v446 = vpop.f32.mrf.mxu0
    %v447 = vpop.f32.mrf.mxu0
    %v448 = vadd.f32 0.0, %v447
    %v449 = vpop.f32.mrf.mxu0
    %450 = vdwg.mxu0
    %v451 = vpack.c.bf16 %v424, %v421
    %v452 = vpack.c.bf16 %v432, %v429
    %v453 = vpack.c.bf16 %v440, %v437
    %v454 = vpack.c.bf16 %v448, %v445
    %v455 = vlaneseq
    %v456 = vshrl.u32 %v455, 7
    %v457 = vsub.s32 0, %v456
    %v458 = vrot.slane %v337, %v457
    %459 = vmatprep.subr.bf16.mxu0 0
    %460 = vmatpush1.bf16.msra.mxu0 0
    %461 = vmatprep.subr.bf16.mxu0 0
    %462 = vmatpush1.bf16.msra.mxu0 0
    %463 = vmatprep.subr.bf16.mxu0 0
    %464 = vmatpush1.bf16.msra.mxu0 0
    %465 = vmatprep.subr.bf16.mxu0 0
    %466 = vmatpush1.bf16.msra.mxu0 0
    %467 = vmatprep.subr.bf16.mxu0 0
    %468 = vmatpush1.bf16.msra.mxu0 %v454
    %469 = vmatprep.subr.bf16.mxu0 0
    %470 = vmatpush1.bf16.msra.mxu0 %v453
    %471 = vmatprep.subr.bf16.mxu0 0
    %472 = vmatpush1.bf16.msra.mxu0 %v452
    %473 = vmatprep.subr.bf16.mxu0 0
    %474 = vmatpush1.bf16.msra.mxu0 %v451
    %475 = vmatprep.subr.bf16.mxu0 0
    %476 = vmatpush2.bf16.msra.mxu0 0
    %477 = vmatprep.subr.bf16.mxu0 0
    %478 = vmatpush2.bf16.msra.mxu0 0
    %479 = vmatprep.subr.bf16.mxu0 0
    %480 = vmatpush2.bf16.msra.mxu0 0
    %481 = vmatprep.subr.bf16.mxu0 0
    %482 = vmatpush2.bf16.msra.mxu0 0
    %483 = vmatprep.subr.bf16.mxu0 0
    %484 = vmatpush2.bf16.msra.mxu0 0
    %485 = vmatprep.subr.bf16.mxu0 0
    %486 = vmatpush2.bf16.msra.mxu0 0
    %487 = vmatprep.subr.bf16.mxu0 0
    %488 = vmatpush2.bf16.msra.mxu0 0
    %489 = vmatprep.subr.bf16.mxu0 0
    %490 = vmatpush2.bf16.msra.mxu0 0
    %491 = vmatprep.mubr.bf16.mxu0 0
    %492 = vmatmul.mubr.bf16.gmra.mxu0 %v232
    %v493 = vpop.f32.mrf.mxu0
    %v494 = vadd.f32 %v458, %v493
    %v495 = vpop.f32.mrf.mxu0
    %v496 = vpop.f32.mrf.mxu0
    %v497 = vadd.f32 %v458, %v496
    %v498 = vpop.f32.mrf.mxu0
    %499 = vmatprep.mubr.bf16.mxu0 0
    %500 = vmatmul.mubr.bf16.gmra.mxu0 %v235
    %v501 = vpop.f32.mrf.mxu0
    %v502 = vadd.f32 %v458, %v501
    %v503 = vpop.f32.mrf.mxu0
    %v504 = vpop.f32.mrf.mxu0
    %v505 = vadd.f32 %v458, %v504
    %v506 = vpop.f32.mrf.mxu0
    %507 = vmatprep.mubr.bf16.mxu0 0
    %508 = vmatmul.mubr.bf16.gmra.mxu0 %v238
    %v509 = vpop.f32.mrf.mxu0
    %v510 = vadd.f32 %v458, %v509
    %v511 = vpop.f32.mrf.mxu0
    %v512 = vpop.f32.mrf.mxu0
    %v513 = vadd.f32 %v458, %v512
    %v514 = vpop.f32.mrf.mxu0
    %515 = vmatprep.mubr.bf16.mxu0 0
    %516 = vmatmul.mubr.bf16.gmra.mxu0 %v241
    %v517 = vpop.f32.mrf.mxu0
    %v518 = vadd.f32 %v458, %v517
    %v519 = vpop.f32.mrf.mxu0
    %v520 = vpop.f32.mrf.mxu0
    %v521 = vadd.f32 %v458, %v520
    %v522 = vpop.f32.mrf.mxu0
    %523 = vdwg.mxu0
    %v524 = vmax.f32 %v494, 0.0
    %v525 = vmax.f32 %v497, 0.0
    %v526 = vmax.f32 %v502, 0.0
    %v527 = vmax.f32 %v505, 0.0
    %v528 = vmax.f32 %v510, 0.0
    %v529 = vmax.f32 %v513, 0.0
    %v530 = vmax.f32 %v518, 0.0
    %v531 = vmax.f32 %v521, 0.0
    %v532 = vpack.c.bf16 %v525, %v524
    %v533 = vpack.c.bf16 %v527, %v526
    %v534 = vpack.c.bf16 %v529, %v528
    %v535 = vpack.c.bf16 %v531, %v530
    %s536 = scalar_lea.vmem [#allocation2], 128
    %v537 = vld [vmem:[%s536] sm:$0xf]
    %v538 = vld [vmem:[%s536 + $0x4] sm:$0xf]
    %v539 = vld [vmem:[%s536 + $0x8] sm:$0xf]
    %v540 = vld [vmem:[%s536 + $0xc] sm:$0xf]
    %v541 = vld [vmem:[%s536 + $0x10] sm:$0xf]
    %v542 = vld [vmem:[%s536 + $0x14] sm:$0xf]
    %v543 = vld [vmem:[%s536 + $0x18] sm:$0xf]
    %v544 = vld [vmem:[%s536 + $0x1c] sm:$0xf]
    %v545 = vld [vmem:[%s536 + $0x20] sm:$0xf]
    %v546 = vld [vmem:[%s536 + $0x24] sm:$0xf]
    %v547 = vld [vmem:[%s536 + $0x28] sm:$0xf]
    %v548 = vld [vmem:[%s536 + $0x2c] sm:$0xf]
    %v549 = vld [vmem:[%s536 + $0x30] sm:$0xf]
    %v550 = vld [vmem:[%s536 + $0x34] sm:$0xf]
    %v551 = vld [vmem:[%s536 + $0x38] sm:$0xf]
    %v552 = vld [vmem:[%s536 + $0x3c] sm:$0xf]
    %v553 = vld [vmem:[%s3 + $0x2] sm:$0x1]
    %v570 = vunpack.c.l.b16 %v537
    %v571 = vunpack.c.l.b16 %v538
    %v572 = vunpack.c.l.b16 %v539
    %v573 = vunpack.c.l.b16 %v540
    %v574 = vunpack.c.l.b16 %v541
    %v575 = vunpack.c.l.b16 %v542
    %v576 = vunpack.c.l.b16 %v543
    %v577 = vunpack.c.l.b16 %v544
    %v578 = vunpack.c.l.b16 %v545
    %v579 = vunpack.c.l.b16 %v546
    %v580 = vunpack.c.l.b16 %v547
    %v581 = vunpack.c.l.b16 %v548
    %v582 = vunpack.c.l.b16 %v549
    %v583 = vunpack.c.l.b16 %v550
    %v584 = vunpack.c.l.b16 %v551
    %v585 = vunpack.c.l.b16 %v552
    %v586 = vpack.c.b16 %v571, %v570
    %v587 = vpack.c.b16 %v573, %v572
    %v588 = vpack.c.b16 %v575, %v574
    %v589 = vpack.c.b16 %v577, %v576
    %v590 = vpack.c.b16 %v579, %v578
    %v591 = vpack.c.b16 %v581, %v580
    %v592 = vpack.c.b16 %v583, %v582
    %v593 = vpack.c.b16 %v585, %v584
    %602 = vmatprep.subr.bf16.mxu0 0
    %603 = vmatpush1.bf16.msra.mxu0 %v593
    %604 = vmatprep.subr.bf16.mxu0 0
    %605 = vmatpush1.bf16.msra.mxu0 %v592
    %606 = vmatprep.subr.bf16.mxu0 0
    %607 = vmatpush1.bf16.msra.mxu0 %v591
    %608 = vmatprep.subr.bf16.mxu0 0
    %609 = vmatpush1.bf16.msra.mxu0 %v590
    %610 = vmatprep.subr.bf16.mxu0 0
    %611 = vmatpush1.bf16.msra.mxu0 %v589
    %612 = vmatprep.subr.bf16.mxu0 0
    %613 = vmatpush1.bf16.msra.mxu0 %v588
    %614 = vmatprep.subr.bf16.mxu0 0
    %615 = vmatpush1.bf16.msra.mxu0 %v587
    %616 = vmatprep.subr.bf16.mxu0 0
    %617 = vmatpush1.bf16.msra.mxu0 %v586
    %618 = vmatprep.subr.bf16.mxu0 0
    %619 = vmatpush2.bf16.msra.mxu0 0
    %620 = vmatprep.subr.bf16.mxu0 0
    %621 = vmatpush2.bf16.msra.mxu0 0
    %622 = vmatprep.subr.bf16.mxu0 0
    %623 = vmatpush2.bf16.msra.mxu0 0
    %624 = vmatprep.subr.bf16.mxu0 0
    %625 = vmatpush2.bf16.msra.mxu0 0
    %626 = vmatprep.subr.bf16.mxu0 0
    %627 = vmatpush2.bf16.msra.mxu0 0
    %628 = vmatprep.subr.bf16.mxu0 0
    %629 = vmatpush2.bf16.msra.mxu0 0
    %630 = vmatprep.subr.bf16.mxu0 0
    %631 = vmatpush2.bf16.msra.mxu0 0
    %632 = vmatprep.subr.bf16.mxu0 0
    %633 = vmatpush2.bf16.msra.mxu0 0
    %634 = vmatprep.mubr.bf16.mxu0 0
    %635 = vmatmul.mubr.bf16.gmra.mxu0 %v532
    %v636 = vpop.f32.mrf.mxu0
    %v637 = vadd.f32 0.0, %v636
    %v638 = vpop.f32.mrf.mxu0
    %v639 = vpop.f32.mrf.mxu0
    %v640 = vadd.f32 0.0, %v639
    %v641 = vpop.f32.mrf.mxu0
    %642 = vmatprep.mubr.bf16.mxu0 0
    %643 = vmatmul.mubr.bf16.gmra.mxu0 %v533
    %v644 = vpop.f32.mrf.mxu0
    %v645 = vadd.f32 0.0, %v644
    %v646 = vpop.f32.mrf.mxu0
    %v647 = vpop.f32.mrf.mxu0
    %v648 = vadd.f32 0.0, %v647
    %v649 = vpop.f32.mrf.mxu0
    %650 = vmatprep.mubr.bf16.mxu0 0
    %651 = vmatmul.mubr.bf16.gmra.mxu0 %v534
    %v652 = vpop.f32.mrf.mxu0
    %v653 = vadd.f32 0.0, %v652
    %v654 = vpop.f32.mrf.mxu0
    %v655 = vpop.f32.mrf.mxu0
    %v656 = vadd.f32 0.0, %v655
    %v657 = vpop.f32.mrf.mxu0
    %658 = vmatprep.mubr.bf16.mxu0 0
    %659 = vmatmul.mubr.bf16.gmra.mxu0 %v535
    %v660 = vpop.f32.mrf.mxu0
    %v661 = vadd.f32 0.0, %v660
    %v662 = vpop.f32.mrf.mxu0
    %v663 = vpop.f32.mrf.mxu0
    %v664 = vadd.f32 0.0, %v663
    %v665 = vpop.f32.mrf.mxu0
    %666 = vdwg.mxu0
    %v667 = vpack.c.bf16 %v640, %v637
    %v668 = vpack.c.bf16 %v648, %v645
    %v669 = vpack.c.bf16 %v656, %v653
    %v670 = vpack.c.bf16 %v664, %v661
    %v671 = vlaneseq
    %v672 = vshrl.u32 %v671, 7
    %v673 = vsub.s32 0, %v672
    %v674 = vrot.slane %v553, %v673
    %675 = vmatprep.subr.bf16.mxu0 0
    %676 = vmatpush1.bf16.msra.mxu0 0
    %677 = vmatprep.subr.bf16.mxu0 0
    %678 = vmatpush1.bf16.msra.mxu0 0
    %679 = vmatprep.subr.bf16.mxu0 0
    %680 = vmatpush1.bf16.msra.mxu0 0
    %681 = vmatprep.subr.bf16.mxu0 0
    %682 = vmatpush1.bf16.msra.mxu0 0
    %683 = vmatprep.subr.bf16.mxu0 0
    %684 = vmatpush1.bf16.msra.mxu0 %v670
    %685 = vmatprep.subr.bf16.mxu0 0
    %686 = vmatpush1.bf16.msra.mxu0 %v669
    %687 = vmatprep.subr.bf16.mxu0 0
    %688 = vmatpush1.bf16.msra.mxu0 %v668
    %689 = vmatprep.subr.bf16.mxu0 0
    %690 = vmatpush1.bf16.msra.mxu0 %v667
    %691 = vmatprep.subr.bf16.mxu0 0
    %692 = vmatpush2.bf16.msra.mxu0 0
    %693 = vmatprep.subr.bf16.mxu0 0
    %694 = vmatpush2.bf16.msra.mxu0 0
    %695 = vmatprep.subr.bf16.mxu0 0
    %696 = vmatpush2.bf16.msra.mxu0 0
    %697 = vmatprep.subr.bf16.mxu0 0
    %698 = vmatpush2.bf16.msra.mxu0 0
    %699 = vmatprep.subr.bf16.mxu0 0
    %700 = vmatpush2.bf16.msra.mxu0 0
    %701 = vmatprep.subr.bf16.mxu0 0
    %702 = vmatpush2.bf16.msra.mxu0 0
    %703 = vmatprep.subr.bf16.mxu0 0
    %704 = vmatpush2.bf16.msra.mxu0 0
    %705 = vmatprep.subr.bf16.mxu0 0
    %706 = vmatpush2.bf16.msra.mxu0 0
    %707 = vmatprep.mubr.bf16.mxu0 0
    %708 = vmatmul.mubr.bf16.gmra.mxu0 %v232
    %v709 = vpop.f32.mrf.mxu0
    %v710 = vadd.f32 %v674, %v709
    %v711 = vpop.f32.mrf.mxu0
    %v712 = vpop.f32.mrf.mxu0
    %v713 = vadd.f32 %v674, %v712
    %v714 = vpop.f32.mrf.mxu0
    %715 = vmatprep.mubr.bf16.mxu0 0
    %716 = vmatmul.mubr.bf16.gmra.mxu0 %v235
    %v717 = vpop.f32.mrf.mxu0
    %v718 = vadd.f32 %v674, %v717
    %v719 = vpop.f32.mrf.mxu0
    %v720 = vpop.f32.mrf.mxu0
    %v721 = vadd.f32 %v674, %v720
    %v722 = vpop.f32.mrf.mxu0
    %723 = vmatprep.mubr.bf16.mxu0 0
    %724 = vmatmul.mubr.bf16.gmra.mxu0 %v238
    %v725 = vpop.f32.mrf.mxu0
    %v726 = vadd.f32 %v674, %v725
    %v727 = vpop.f32.mrf.mxu0
    %v728 = vpop.f32.mrf.mxu0
    %v729 = vadd.f32 %v674, %v728
    %v730 = vpop.f32.mrf.mxu0
    %731 = vmatprep.mubr.bf16.mxu0 0
    %732 = vmatmul.mubr.bf16.gmra.mxu0 %v241
    %v733 = vpop.f32.mrf.mxu0
    %v734 = vadd.f32 %v674, %v733
    %v735 = vpop.f32.mrf.mxu0
    %v736 = vpop.f32.mrf.mxu0
    %v737 = vadd.f32 %v674, %v736
    %v738 = vpop.f32.mrf.mxu0
    %739 = vdwg.mxu0
    %740 = vst [vmem:[%s4] sm:$0xff] %v710
    %741 = vst [vmem:[%s4 + $0x8] sm:$0xff] %v713
    %742 = vst [vmem:[%s4 + $0x10] sm:$0xff] %v718
    %743 = vst [vmem:[%s4 + $0x18] sm:$0xff] %v721
    %744 = vst [vmem:[%s4 + $0x20] sm:$0xff] %v726
    %745 = vst [vmem:[%s4 + $0x28] sm:$0xff] %v729
    %746 = vst [vmem:[%s4 + $0x30] sm:$0xff] %v734
    %747 = vst [vmem:[%s4 + $0x38] sm:$0xff] %v737
    // Predicated region
    $region22: #{forward.1} parent=1 // pred_check
      _
    $region23: #{forward.1} parent=1 // pred_check_branch
      %749 = sbr.rel (0) target = $region25
    $region24: #{forward.1} parent=1 // pred_region
      _
    $region25: #{forward.1} parent=1 // pred_fallthru
      _
    // Predicated region
    $region26: #{forward.1} parent=1 // pred_check
      _
    $region27: #{forward.1} parent=1 // pred_check_branch
      %751 = sbr.rel (0) target = $region29
    $region28: #{forward.1} parent=1 // pred_region
      _
    $region29: #{forward.1} parent=1 // pred_fallthru
      _
    %752 = vsyncpa [#allocation3], 1

</llo_original>
